<compile_context>
chip_gen: v7x
topology: tpu7x:2x2x1
jax: 0.10.0
libtpu: 0.0.40
codegen_flags: <defaults>
</compile_context>

<pallas_src>
import functools
import math

import jax
import jax.numpy as jnp
from jax.experimental import pallas as pl
from jax.experimental.pallas import tpu as pltpu


def dueling_q_kernel(x_ref, w_ref, b_ref, out_ref, *, output_dim):
    """x_ref: (B,128) f32; w_ref: (5,128,128) bf16; b_ref: (5,128) f32; out_ref: (B,128) f32."""
    batch = x_ref.shape[0]
    x = x_ref[...]  # f32

    def layer(h_f32, idx):
        # bf16 operands into the MXU, f32 accumulate, f32 bias-add.
        return (jnp.dot(h_f32.astype(jnp.bfloat16), w_ref[idx],
                        preferred_element_type=jnp.float32)
                + b_ref[idx:idx + 1, :])

    # ---- shared trunk: 3 x (Linear -> ReLU) ----
    h = jnp.maximum(layer(x, 0), 0.0)
    h = jnp.maximum(layer(h, 1), 0.0)
    feat = jnp.maximum(layer(h, 2), 0.0)

    # ---- fused heads, first layer: [value-hidden | advantage-hidden] in one matmul ----
    head = jnp.maximum(layer(feat, 3), 0.0)

    # ---- fused heads, second layer: block-diagonal, zero-padded to 128 lanes ----
    # y[:, 0] = value, y[:, 1:1+out] = advantages, y[:, 1+out:] = exactly 0.
    y = layer(head, 4)

    values = y[:, 0:1]  # (B, 1)

    # Global mean over real batch rows x real advantage columns. Columns >= 1+output_dim are
    # exactly zero by construction, so adv_sum = sum(y) - sum(value column). No masks needed.
    adv_sum = jnp.sum(y) - jnp.sum(values)
    adv_mean = adv_sum * (1.0 / (batch * output_dim))

    # Lane-dense (B,128) store; only cols 1..1+output_dim are meaningful Q-values.
    out_ref[...] = values + (y - adv_mean)


def init_linear_params(key, fan_in, fan_out):
    """Deterministic init mimicking nn.Linear's default U(-1/sqrt(fan_in), +...)."""
    kw, kb = jax.random.split(key)
    bound = 1.0 / math.sqrt(fan_in)
    w = jax.random.uniform(kw, (fan_in, fan_out), jnp.float32, -bound, bound)  # (in, out)
    b = jax.random.uniform(kb, (1, fan_out), jnp.float32, -bound, bound)
    return w, b


def pack_params(params, input_dim, output_dim):
    """Fuse/stack the 14 small parameter arrays into 2 lane-dense operands."""
    (w1, b1), (w2, b2), (w3, b3), (wv1, bv1), (wv2, bv2), (wa1, ba1), (wa2, ba2) = params

    # Layer 1 zero-padded to K=128 so all matmuls are uniform 128x128.
    w1p = jnp.zeros((128, 128), jnp.float32).at[:input_dim, :].set(w1)

    # Fused head first layer: (128, 128) = [wv1 | wa1], bias (1, 128) = [bv1 | ba1].
    wh1 = jnp.concatenate([wv1, wa1], axis=1)
    bh1 = jnp.concatenate([bv1, ba1], axis=1)

    # Fused head second layer: block-diagonal, zero-padded to 128 output lanes.
    wh2 = jnp.zeros((128, 128), jnp.float32)
    wh2 = wh2.at[0:64, 0:1].set(wv2)                       # value column
    wh2 = wh2.at[64:128, 1:1 + output_dim].set(wa2)        # advantage columns
    bh2 = jnp.zeros((1, 128), jnp.float32)
    bh2 = bh2.at[:, 0:1].set(bv2)
    bh2 = bh2.at[:, 1:1 + output_dim].set(ba2)

    # bf16 weights (MXU-native); biases stay f32 for the VPU bias-add path.
    w_stack = jnp.stack([w1p, w2, w3, wh1, wh2], axis=0).astype(jnp.bfloat16)  # (5,128,128)
    b_all = jnp.concatenate([b1, b2, b3, bh1, bh2], axis=0)                    # (5,128) f32
    return w_stack, b_all


@functools.partial(jax.jit, static_argnames=("output_dim",))
def dueling_qnetwork(x, w_stack, b_all, output_dim):
    batch, in_dim = x.shape
    # Lane-pad the input features to 128 (zeros meet zero weight rows -> no effect).
    if in_dim != 128:
        x = jnp.pad(x, ((0, 0), (0, 128 - in_dim)))

    kernel = functools.partial(dueling_q_kernel, output_dim=output_dim)

    out = pl.pallas_call(
        kernel,
        out_shape=jax.ShapeDtypeStruct((batch, 128), jnp.float32),
        # Whole problem (~0.2 MiB) fits in one VMEM block; no grid needed, which also keeps
        # the GLOBAL advantage mean trivially correct (no cross-tile reduction).
        # TODO(synk): for very large batches on v7x add a 'parallel' batch grid axis and a
        # two-pass mean so both TensorCores are used.
        in_specs=[pl.BlockSpec(memory_space=pltpu.MemorySpace.VMEM)] * 3,
        out_specs=pl.BlockSpec(memory_space=pltpu.MemorySpace.VMEM),
        cost_estimate=pl.CostEstimate(
            flops=2 * batch * 128 * 128 * 5,
            transcendentals=0,
            bytes_accessed=(5 * 128 * 128 * 2     # bf16 weight stack
                            + 5 * 128 * 4         # f32 biases
                            + 2 * batch * 128 * 4),  # x in + out
        ),
    )(x, w_stack, b_all)

    # Q-values live in cols 1..1+output_dim of the lane-dense output tile.
    return out[:, 1:1 + output_dim]


if __name__ == "__main__":
    INPUT_DIM = 16
    OUTPUT_DIM = 4
    BATCH = 8

    root = jax.random.PRNGKey(0)
    keys = jax.random.split(root, 8)

    params = (
        init_linear_params(keys[0], INPUT_DIM, 128),  # fc[0]
        init_linear_params(keys[1], 128, 128),        # fc[2]
        init_linear_params(keys[2], 128, 128),        # fc[4]
        init_linear_params(keys[3], 128, 64),         # value_stream[0]
        init_linear_params(keys[4], 64, 1),           # value_stream[2]
        init_linear_params(keys[5], 128, 64),         # advantage_stream[0]
        init_linear_params(keys[6], 64, OUTPUT_DIM),  # advantage_stream[2]
    )

    x = jax.random.normal(keys[7], (BATCH, INPUT_DIM), jnp.float32)

    w_stack, b_all = pack_params(params, INPUT_DIM, OUTPUT_DIM)
    qvals = dueling_qnetwork(x, w_stack, b_all, output_dim=OUTPUT_DIM)
    jax.block_until_ready(qvals)

    # Pure-JAX reference of the original (unfused) math, with matmul operands in bf16 to
    # match the kernel's MXU precision (bias/ReLU/mean in f32).
    def ref(x, params):
        def lin(h, w, b):
            return jnp.dot(h.astype(jnp.bfloat16), w.astype(jnp.bfloat16),
                           preferred_element_type=jnp.float32) + b
        (rw1, rb1), (rw2, rb2), (rw3, rb3), (rwv1, rbv1), (rwv2, rbv2), (rwa1, rba1), (rwa2, rba2) = params
        h = jax.nn.relu(lin(x, rw1, rb1))
        h = jax.nn.relu(lin(h, rw2, rb2))
        f = jax.nn.relu(lin(h, rw3, rb3))
        v = lin(jax.nn.relu(lin(f, rwv1, rbv1)), rwv2, rbv2)
        a = lin(jax.nn.relu(lin(f, rwa1, rba1)), rwa2, rba2)
        return v + (a - a.mean())   # NB: GLOBAL mean, matching the PyTorch module

    expected = ref(x, params)
    assert qvals.shape == (BATCH, OUTPUT_DIM)
    assert jnp.allclose(qvals, expected, atol=1e-2, rtol=1e-2)

    print("KERNEL_OK")
</pallas_src>

<mosaic_0001>
module attributes {stable_mosaic.version = 11 : i64} {
  func.func @dueling_q_kernel(%arg0: memref<8x128xf32, #tpu.memory_space<vmem>>, %arg1: memref<5x128x128xbf16, #tpu.memory_space<vmem>>, %arg2: memref<5x128xf32, #tpu.memory_space<vmem>>, %arg3: memref<8x128xf32, #tpu.memory_space<vmem>>) attributes {dimension_semantics = [], scalar_prefetch = 0 : i64, scratch_operands = 0 : i64, tpu.core_type = #tpu.core_type<tc>} {
    %c0 = arith.constant 0 : index
    %c0_0 = arith.constant 0 : index
    %0 = vector.load %arg0[%c0, %c0_0] : memref<8x128xf32, #tpu.memory_space<vmem>>, vector<8x128xf32>
    %1 = arith.truncf %0 : vector<8x128xf32> to vector<8x128xbf16>
    %c0_1 = arith.constant 0 : index
    %c0_2 = arith.constant 0 : index
    %c0_3 = arith.constant 0 : index
    %2 = vector.load %arg1[%c0_1, %c0_2, %c0_3] : memref<5x128x128xbf16, #tpu.memory_space<vmem>>, vector<1x128x128xbf16>
    %3 = vector.shape_cast %2 : vector<1x128x128xbf16> to vector<128x128xbf16>
    %cst = arith.constant dense<0.000000e+00> : vector<8x128xf32>
    %4 = tpu.matmul %1, %3, %cst {dimension_numbers = #tpu.dot_dimension_numbers<[1], [0], [0], [1], [0, 0, 1, 1], [], []>} : vector<8x128xbf16>, vector<128x128xbf16>, vector<8x128xf32> -> vector<8x128xf32>
    %c0_4 = arith.constant 0 : index
    %c0_5 = arith.constant 0 : index
    %5 = vector.load %arg2[%c0_4, %c0_5] : memref<5x128xf32, #tpu.memory_space<vmem>>, vector<1x128xf32>
    %6 = vector.broadcast %5 : vector<1x128xf32> to vector<8x128xf32>
    %7 = arith.addf %4, %6 : vector<8x128xf32>
    %cst_6 = arith.constant 0.000000e+00 : f32
    %8 = vector.broadcast %cst_6 : f32 to vector<8x128xf32>
    %9 = arith.maximumf %7, %8 : vector<8x128xf32>
    %10 = arith.truncf %9 : vector<8x128xf32> to vector<8x128xbf16>
    %c1 = arith.constant 1 : index
    %c0_7 = arith.constant 0 : index
    %c0_8 = arith.constant 0 : index
    %11 = vector.load %arg1[%c1, %c0_7, %c0_8] : memref<5x128x128xbf16, #tpu.memory_space<vmem>>, vector<1x128x128xbf16>
    %12 = vector.shape_cast %11 : vector<1x128x128xbf16> to vector<128x128xbf16>
    %cst_9 = arith.constant dense<0.000000e+00> : vector<8x128xf32>
    %13 = tpu.matmul %10, %12, %cst_9 {dimension_numbers = #tpu.dot_dimension_numbers<[1], [0], [0], [1], [0, 0, 1, 1], [], []>} : vector<8x128xbf16>, vector<128x128xbf16>, vector<8x128xf32> -> vector<8x128xf32>
    %c1_10 = arith.constant 1 : index
    %c0_11 = arith.constant 0 : index
    %14 = vector.load %arg2[%c1_10, %c0_11] : memref<5x128xf32, #tpu.memory_space<vmem>>, vector<1x128xf32>
    %15 = vector.broadcast %14 : vector<1x128xf32> to vector<8x128xf32>
    %16 = arith.addf %13, %15 : vector<8x128xf32>
    %cst_12 = arith.constant 0.000000e+00 : f32
    %17 = vector.broadcast %cst_12 : f32 to vector<8x128xf32>
    %18 = arith.maximumf %16, %17 : vector<8x128xf32>
    %19 = arith.truncf %18 : vector<8x128xf32> to vector<8x128xbf16>
    %c2 = arith.constant 2 : index
    %c0_13 = arith.constant 0 : index
    %c0_14 = arith.constant 0 : index
    %20 = vector.load %arg1[%c2, %c0_13, %c0_14] : memref<5x128x128xbf16, #tpu.memory_space<vmem>>, vector<1x128x128xbf16>
    %21 = vector.shape_cast %20 : vector<1x128x128xbf16> to vector<128x128xbf16>
    %cst_15 = arith.constant dense<0.000000e+00> : vector<8x128xf32>
    %22 = tpu.matmul %19, %21, %cst_15 {dimension_numbers = #tpu.dot_dimension_numbers<[1], [0], [0], [1], [0, 0, 1, 1], [], []>} : vector<8x128xbf16>, vector<128x128xbf16>, vector<8x128xf32> -> vector<8x128xf32>
    %c2_16 = arith.constant 2 : index
    %c0_17 = arith.constant 0 : index
    %23 = vector.load %arg2[%c2_16, %c0_17] : memref<5x128xf32, #tpu.memory_space<vmem>>, vector<1x128xf32>
    %24 = vector.broadcast %23 : vector<1x128xf32> to vector<8x128xf32>
    %25 = arith.addf %22, %24 : vector<8x128xf32>
    %cst_18 = arith.constant 0.000000e+00 : f32
    %26 = vector.broadcast %cst_18 : f32 to vector<8x128xf32>
    %27 = arith.maximumf %25, %26 : vector<8x128xf32>
    %28 = arith.truncf %27 : vector<8x128xf32> to vector<8x128xbf16>
    %c3 = arith.constant 3 : index
    %c0_19 = arith.constant 0 : index
    %c0_20 = arith.constant 0 : index
    %29 = vector.load %arg1[%c3, %c0_19, %c0_20] : memref<5x128x128xbf16, #tpu.memory_space<vmem>>, vector<1x128x128xbf16>
    %30 = vector.shape_cast %29 : vector<1x128x128xbf16> to vector<128x128xbf16>
    %cst_21 = arith.constant dense<0.000000e+00> : vector<8x128xf32>
    %31 = tpu.matmul %28, %30, %cst_21 {dimension_numbers = #tpu.dot_dimension_numbers<[1], [0], [0], [1], [0, 0, 1, 1], [], []>} : vector<8x128xbf16>, vector<128x128xbf16>, vector<8x128xf32> -> vector<8x128xf32>
    %c3_22 = arith.constant 3 : index
    %c0_23 = arith.constant 0 : index
    %32 = vector.load %arg2[%c3_22, %c0_23] : memref<5x128xf32, #tpu.memory_space<vmem>>, vector<1x128xf32>
    %33 = vector.broadcast %32 : vector<1x128xf32> to vector<8x128xf32>
    %34 = arith.addf %31, %33 : vector<8x128xf32>
    %cst_24 = arith.constant 0.000000e+00 : f32
    %35 = vector.broadcast %cst_24 : f32 to vector<8x128xf32>
    %36 = arith.maximumf %34, %35 : vector<8x128xf32>
    %37 = arith.truncf %36 : vector<8x128xf32> to vector<8x128xbf16>
    %c4 = arith.constant 4 : index
    %c0_25 = arith.constant 0 : index
    %c0_26 = arith.constant 0 : index
    %38 = vector.load %arg1[%c4, %c0_25, %c0_26] : memref<5x128x128xbf16, #tpu.memory_space<vmem>>, vector<1x128x128xbf16>
    %39 = vector.shape_cast %38 : vector<1x128x128xbf16> to vector<128x128xbf16>
    %cst_27 = arith.constant dense<0.000000e+00> : vector<8x128xf32>
    %40 = tpu.matmul %37, %39, %cst_27 {dimension_numbers = #tpu.dot_dimension_numbers<[1], [0], [0], [1], [0, 0, 1, 1], [], []>} : vector<8x128xbf16>, vector<128x128xbf16>, vector<8x128xf32> -> vector<8x128xf32>
    %c4_28 = arith.constant 4 : index
    %c0_29 = arith.constant 0 : index
    %41 = vector.load %arg2[%c4_28, %c0_29] : memref<5x128xf32, #tpu.memory_space<vmem>>, vector<1x128xf32>
    %42 = vector.broadcast %41 : vector<1x128xf32> to vector<8x128xf32>
    %43 = arith.addf %40, %42 : vector<8x128xf32>
    %44 = vector.extract_strided_slice %43 {offsets = [0, 0], sizes = [8, 1], strides = [1, 1]} : vector<8x128xf32> to vector<8x1xf32>
    %45 = vector.shape_cast %43 : vector<8x128xf32> to vector<1x8x128xf32>
    %cst_30 = arith.constant dense<0.000000e+00> : vector<1xf32>
    %46 = vector.multi_reduction <add>, %45, %cst_30 [1, 2] : vector<1x8x128xf32> to vector<1xf32>
    %47 = vector.shape_cast %46 : vector<1xf32> to vector<1x1x1xf32>
    %48 = vector.extract %47[0, 0, 0] : f32 from vector<1x1x1xf32>
    %49 = vector.shape_cast %44 : vector<8x1xf32> to vector<1x8x1xf32>
    %cst_31 = arith.constant dense<0.000000e+00> : vector<1xf32>
    %50 = vector.multi_reduction <add>, %49, %cst_31 [1, 2] : vector<1x8x1xf32> to vector<1xf32>
    %51 = vector.shape_cast %50 : vector<1xf32> to vector<1x1x1xf32>
    %52 = vector.extract %51[0, 0, 0] : f32 from vector<1x1x1xf32>
    %53 = arith.subf %48, %52 : f32
    %cst_32 = arith.constant 3.125000e-02 : f32
    %54 = arith.mulf %53, %cst_32 : f32
    %55 = vector.broadcast %54 : f32 to vector<8x128xf32>
    %56 = arith.subf %43, %55 : vector<8x128xf32>
    %57 = vector.broadcast %44 : vector<8x1xf32> to vector<8x128xf32>
    %58 = arith.addf %57, %56 : vector<8x128xf32>
    %c0_33 = arith.constant 0 : index
    %c0_34 = arith.constant 0 : index
    %59 = vector.load %arg3[%c0_33, %c0_34] : memref<8x128xf32, #tpu.memory_space<vmem>>, vector<8x128xf32>
    tpu.vector_store %arg3[%c0_33, %c0_34], %58 {strides = array<i32>} : memref<8x128xf32, #tpu.memory_space<vmem>>, vector<8x128xf32>,
    return
  }
}

</mosaic_0001>

<llo_original>
// kernel: dueling_qnetwork.1
$region0: #{dueling_qnetwork.1}
  #allocation0 [shape = 'u32[]', space=smem, size = 0x4, offset = 0x4, fixed_abs, tag = 'smem constant byte address 0x4 - core index']
  #allocation1 [shape = 'u32[144,128]{1,0:T(1,128)}', space=vmem, size = 0x12000, scoped, tag = 'internal scratch']
  %s0 = inlined_call_operand.vmem [shape: f32[8,128], index: 0, kind: input, shape index: {}]
  %s1 = inlined_call_operand.hbm [shape: bf16[5,128,128], index: 1, kind: input, shape index: {}]
  %s2 = inlined_call_operand.vmem [shape: f32[5,128], index: 2, kind: input, shape index: {}]
  %s3 = inlined_call_operand.vmem [shape: f32[8,128], index: 3, kind: output, shape index: {}]
  %s4 = sld [smem:[#allocation0]]
  $region26: #{dueling_qnetwork.1} parent=0
    _
  %s6 = ssub.s32 1, %s4
  %s7 = scalar_select 0, %s6, %s4
  $region1: #{dueling_qnetwork.1} parent=0
    #allocation2 [shape = 'u8[163840]{0}', space=vmem, size = 0x28000, scoped, tag = 'input window, operand 1, single buffered']
    #allocation3 [shape = 's32[1]{0}', space=sflag, size = 0x4, scoped, tag = 'scoped memory for dueling_qnetwork.1']
    %8 = vsyncpa [#allocation3], 0
    // Predicated region
    $region2: #{dueling_qnetwork.1} parent=1 // pred_check
      _
    $region3: #{dueling_qnetwork.1} parent=1 // pred_check_branch
      %10 = sbr.rel (0) target = $region5
    $region4: #{dueling_qnetwork.1} parent=1 // pred_region
      _
    $region5: #{dueling_qnetwork.1} parent=1 // pred_fallthru
      _
    // Predicated region
    $region6: #{dueling_qnetwork.1} parent=1 // pred_check
      _
    $region7: #{dueling_qnetwork.1} parent=1 // pred_check_branch
      %12 = sbr.rel (0) target = $region9
    $region8: #{dueling_qnetwork.1} parent=1 // pred_region
      %s14 = ssub.s32 5120, 5120
      %15 = vsyncadd [#allocation3], %s14
      %s16 = sshll.u32 [#allocation2], 4
      %s17 = int_to_ptr.vmem [resolvable:$true] %s16
      %22 = dma.hbm_to_vmem [thread:$0]  %s1, 5120, %s17, [#allocation3], 64, 64, 4
    $region9: #{dueling_qnetwork.1} parent=1 // pred_fallthru
      _
    // Predicated region
    $region10: #{dueling_qnetwork.1} parent=1 // pred_check
      _
    $region11: #{dueling_qnetwork.1} parent=1 // pred_check_branch
      %24 = sbr.rel (0) target = $region13
    $region12: #{dueling_qnetwork.1} parent=1 // pred_region
      _
    $region13: #{dueling_qnetwork.1} parent=1 // pred_fallthru
      _
    // Predicated region
    $region14: #{dueling_qnetwork.1} parent=1 // pred_check
      _
    $region15: #{dueling_qnetwork.1} parent=1 // pred_check_branch
      %26 = sbr.rel (0) target = $region17
    $region16: #{dueling_qnetwork.1} parent=1 // pred_region
      %27 = dma.done [#allocation3], 5120
    $region17: #{dueling_qnetwork.1} parent=1 // pred_fallthru
      _
    %v29 = vld [vmem:[%s0] sm:$0xff]
    %v30 = vpack.c.bf16 %v29, %v29
    %v31 = vld [vmem:[#allocation2] sm:$0xf]
    %v32 = vld [vmem:[#allocation2 + $0x4] sm:$0xf]
    %v33 = vld [vmem:[#allocation2 + $0x8] sm:$0xf]
    %v34 = vld [vmem:[#allocation2 + $0xc] sm:$0xf]
    %v35 = vld [vmem:[#allocation2 + $0x10] sm:$0xf]
    %v36 = vld [vmem:[#allocation2 + $0x14] sm:$0xf]
    %v37 = vld [vmem:[#allocation2 + $0x18] sm:$0xf]
    %v38 = vld [vmem:[#allocation2 + $0x1c] sm:$0xf]
    %v39 = vld [vmem:[#allocation2 + $0x20] sm:$0xf]
    %v40 = vld [vmem:[#allocation2 + $0x24] sm:$0xf]
    %v41 = vld [vmem:[#allocation2 + $0x28] sm:$0xf]
    %v42 = vld [vmem:[#allocation2 + $0x2c] sm:$0xf]
    %v43 = vld [vmem:[#allocation2 + $0x30] sm:$0xf]
    %v44 = vld [vmem:[#allocation2 + $0x34] sm:$0xf]
    %v45 = vld [vmem:[#allocation2 + $0x38] sm:$0xf]
    %v46 = vld [vmem:[#allocation2 + $0x3c] sm:$0xf]
    %v47 = vld [vmem:[%s2] sm:$0x1]
    %v48 = vlaneseq
    %v49 = vshrl.u32 %v48, 7
    %v50 = vsub.s32 0, %v49
    %v51 = vrot.slane %v47, %v50
    %v68 = vunpack.c.l.b16 %v31
    %v69 = vunpack.c.l.b16 %v32
    %v70 = vunpack.c.l.b16 %v33
    %v71 = vunpack.c.l.b16 %v34
    %v72 = vunpack.c.l.b16 %v35
    %v73 = vunpack.c.l.b16 %v36
    %v74 = vunpack.c.l.b16 %v37
    %v75 = vunpack.c.l.b16 %v38
    %v76 = vunpack.c.l.b16 %v39
    %v77 = vunpack.c.l.b16 %v40
    %v78 = vunpack.c.l.b16 %v41
    %v79 = vunpack.c.l.b16 %v42
    %v80 = vunpack.c.l.b16 %v43
    %v81 = vunpack.c.l.b16 %v44
    %v82 = vunpack.c.l.b16 %v45
    %v83 = vunpack.c.l.b16 %v46
    %v84 = vpack.c.b16 %v69, %v68
    %v85 = vpack.c.b16 %v71, %v70
    %v86 = vpack.c.b16 %v73, %v72
    %v87 = vpack.c.b16 %v75, %v74
    %v88 = vpack.c.b16 %v77, %v76
    %v89 = vpack.c.b16 %v79, %v78
    %v90 = vpack.c.b16 %v81, %v80
    %v91 = vpack.c.b16 %v83, %v82
    %100 = vmatprep.subr.bf16.mxu0 0
    %101 = vmatpush1.bf16.msra.mxu0 %v84
    %102 = vmatprep.subr.bf16.mxu0 0
    %103 = vmatpush1.bf16.msra.mxu0 %v85
    %104 = vmatprep.subr.bf16.mxu0 0
    %105 = vmatpush1.bf16.msra.mxu0 %v86
    %106 = vmatprep.subr.bf16.mxu0 0
    %107 = vmatpush1.bf16.msra.mxu0 %v87
    %108 = vmatprep.subr.bf16.mxu0 0
    %109 = vmatpush1.bf16.msra.mxu0 %v88
    %110 = vmatprep.subr.bf16.mxu0 0
    %111 = vmatpush1.bf16.msra.mxu0 %v89
    %112 = vmatprep.subr.bf16.mxu0 0
    %113 = vmatpush1.bf16.msra.mxu0 %v90
    %114 = vmatprep.subr.bf16.mxu0 0
    %115 = vmatpush1.bf16.msra.mxu0 %v91
    %116 = vmatprep.subr.bf16.mxu0 0
    %117 = vmatpush1.bf16.msra.mxu0 0
    %118 = vmatprep.subr.bf16.mxu0 0
    %119 = vmatpush1.bf16.msra.mxu0 0
    %120 = vmatprep.subr.bf16.mxu0 0
    %121 = vmatpush1.bf16.msra.mxu0 0
    %122 = vmatprep.subr.bf16.mxu0 0
    %123 = vmatpush1.bf16.msra.mxu0 0
    %124 = vmatprep.subr.bf16.mxu0 0
    %125 = vmatpush1.bf16.msra.mxu0 0
    %126 = vmatprep.subr.bf16.mxu0 0
    %127 = vmatpush1.bf16.msra.mxu0 0
    %128 = vmatprep.subr.bf16.mxu0 0
    %129 = vmatpush1.bf16.msra.mxu0 0
    %130 = vmatprep.subr.bf16.mxu0 0
    %131 = vmatpush1.bf16.msra.mxu0 0
    %132 = vmatprep.mubr.bf16.mxu0 0
    %133 = vmatmul.mubr.bf16.gmra.mrb[0].mxu0 %v30
    %v134 = vpop.f32.mrb[0].mxu0
    %v135 = vadd.f32 %v51, %v134
    %v136 = vpop.f32.mrb[0].mxu0
    %v137 = vpop.f32.mrb[0].mxu0
    %v138 = vpop.f32.mrb[0].mxu0
    %139 = vdwg.mxu0
    %v140 = vmax.f32 %v135, 0.0
    %v141 = vpack.c.bf16 %v140, %v140
    %s142 = scalar_lea.vmem [#allocation2], 64
    %v143 = vld [vmem:[%s142] sm:$0xf]
    %v144 = vld [vmem:[%s142 + $0x4] sm:$0xf]
    %v145 = vld [vmem:[%s142 + $0x8] sm:$0xf]
    %v146 = vld [vmem:[%s142 + $0xc] sm:$0xf]
    %v147 = vld [vmem:[%s142 + $0x10] sm:$0xf]
    %v148 = vld [vmem:[%s142 + $0x14] sm:$0xf]
    %v149 = vld [vmem:[%s142 + $0x18] sm:$0xf]
    %v150 = vld [vmem:[%s142 + $0x1c] sm:$0xf]
    %v151 = vld [vmem:[%s142 + $0x20] sm:$0xf]
    %v152 = vld [vmem:[%s142 + $0x24] sm:$0xf]
    %v153 = vld [vmem:[%s142 + $0x28] sm:$0xf]
    %v154 = vld [vmem:[%s142 + $0x2c] sm:$0xf]
    %v155 = vld [vmem:[%s142 + $0x30] sm:$0xf]
    %v156 = vld [vmem:[%s142 + $0x34] sm:$0xf]
    %v157 = vld [vmem:[%s142 + $0x38] sm:$0xf]
    %v158 = vld [vmem:[%s142 + $0x3c] sm:$0xf]
    %v159 = vld [vmem:[%s2 + $0x1] sm:$0x1]
    %v160 = vlaneseq
    %v161 = vshrl.u32 %v160, 7
    %v162 = vsub.s32 0, %v161
    %v163 = vrot.slane %v159, %v162
    %v180 = vunpack.c.l.b16 %v143
    %v181 = vunpack.c.l.b16 %v144
    %v182 = vunpack.c.l.b16 %v145
    %v183 = vunpack.c.l.b16 %v146
    %v184 = vunpack.c.l.b16 %v147
    %v185 = vunpack.c.l.b16 %v148
    %v186 = vunpack.c.l.b16 %v149
    %v187 = vunpack.c.l.b16 %v150
    %v188 = vunpack.c.l.b16 %v151
    %v189 = vunpack.c.l.b16 %v152
    %v190 = vunpack.c.l.b16 %v153
    %v191 = vunpack.c.l.b16 %v154
    %v192 = vunpack.c.l.b16 %v155
    %v193 = vunpack.c.l.b16 %v156
    %v194 = vunpack.c.l.b16 %v157
    %v195 = vunpack.c.l.b16 %v158
    %v196 = vpack.c.b16 %v181, %v180
    %v197 = vpack.c.b16 %v183, %v182
    %v198 = vpack.c.b16 %v185, %v184
    %v199 = vpack.c.b16 %v187, %v186
    %v200 = vpack.c.b16 %v189, %v188
    %v201 = vpack.c.b16 %v191, %v190
    %v202 = vpack.c.b16 %v193, %v192
    %v203 = vpack.c.b16 %v195, %v194
    %212 = vmatprep.subr.bf16.mxu0 0
    %213 = vmatpush1.bf16.msra.mxu0 %v196
    %214 = vmatprep.subr.bf16.mxu0 0
    %215 = vmatpush1.bf16.msra.mxu0 %v197
    %216 = vmatprep.subr.bf16.mxu0 0
    %217 = vmatpush1.bf16.msra.mxu0 %v198
    %218 = vmatprep.subr.bf16.mxu0 0
    %219 = vmatpush1.bf16.msra.mxu0 %v199
    %220 = vmatprep.subr.bf16.mxu0 0
    %221 = vmatpush1.bf16.msra.mxu0 %v200
    %222 = vmatprep.subr.bf16.mxu0 0
    %223 = vmatpush1.bf16.msra.mxu0 %v201
    %224 = vmatprep.subr.bf16.mxu0 0
    %225 = vmatpush1.bf16.msra.mxu0 %v202
    %226 = vmatprep.subr.bf16.mxu0 0
    %227 = vmatpush1.bf16.msra.mxu0 %v203
    %228 = vmatprep.subr.bf16.mxu0 0
    %229 = vmatpush1.bf16.msra.mxu0 0
    %230 = vmatprep.subr.bf16.mxu0 0
    %231 = vmatpush1.bf16.msra.mxu0 0
    %232 = vmatprep.subr.bf16.mxu0 0
    %233 = vmatpush1.bf16.msra.mxu0 0
    %234 = vmatprep.subr.bf16.mxu0 0
    %235 = vmatpush1.bf16.msra.mxu0 0
    %236 = vmatprep.subr.bf16.mxu0 0
    %237 = vmatpush1.bf16.msra.mxu0 0
    %238 = vmatprep.subr.bf16.mxu0 0
    %239 = vmatpush1.bf16.msra.mxu0 0
    %240 = vmatprep.subr.bf16.mxu0 0
    %241 = vmatpush1.bf16.msra.mxu0 0
    %242 = vmatprep.subr.bf16.mxu0 0
    %243 = vmatpush1.bf16.msra.mxu0 0
    %244 = vmatprep.mubr.bf16.mxu0 0
    %245 = vmatmul.mubr.bf16.gmra.mrb[0].mxu0 %v141
    %v246 = vpop.f32.mrb[0].mxu0
    %v247 = vadd.f32 %v163, %v246
    %v248 = vpop.f32.mrb[0].mxu0
    %v249 = vpop.f32.mrb[0].mxu0
    %v250 = vpop.f32.mrb[0].mxu0
    %251 = vdwg.mxu0
    %v252 = vmax.f32 %v247, 0.0
    %v253 = vpack.c.bf16 %v252, %v252
    %s254 = scalar_lea.vmem [#allocation2], 128
    %v255 = vld [vmem:[%s254] sm:$0xf]
    %v256 = vld [vmem:[%s254 + $0x4] sm:$0xf]
    %v257 = vld [vmem:[%s254 + $0x8] sm:$0xf]
    %v258 = vld [vmem:[%s254 + $0xc] sm:$0xf]
    %v259 = vld [vmem:[%s254 + $0x10] sm:$0xf]
    %v260 = vld [vmem:[%s254 + $0x14] sm:$0xf]
    %v261 = vld [vmem:[%s254 + $0x18] sm:$0xf]
    %v262 = vld [vmem:[%s254 + $0x1c] sm:$0xf]
    %v263 = vld [vmem:[%s254 + $0x20] sm:$0xf]
    %v264 = vld [vmem:[%s254 + $0x24] sm:$0xf]
    %v265 = vld [vmem:[%s254 + $0x28] sm:$0xf]
    %v266 = vld [vmem:[%s254 + $0x2c] sm:$0xf]
    %v267 = vld [vmem:[%s254 + $0x30] sm:$0xf]
    %v268 = vld [vmem:[%s254 + $0x34] sm:$0xf]
    %v269 = vld [vmem:[%s254 + $0x38] sm:$0xf]
    %v270 = vld [vmem:[%s254 + $0x3c] sm:$0xf]
    %v271 = vld [vmem:[%s2 + $0x2] sm:$0x1]
    %v272 = vlaneseq
    %v273 = vshrl.u32 %v272, 7
    %v274 = vsub.s32 0, %v273
    %v275 = vrot.slane %v271, %v274
    %v292 = vunpack.c.l.b16 %v255
    %v293 = vunpack.c.l.b16 %v256
    %v294 = vunpack.c.l.b16 %v257
    %v295 = vunpack.c.l.b16 %v258
    %v296 = vunpack.c.l.b16 %v259
    %v297 = vunpack.c.l.b16 %v260
    %v298 = vunpack.c.l.b16 %v261
    %v299 = vunpack.c.l.b16 %v262
    %v300 = vunpack.c.l.b16 %v263
    %v301 = vunpack.c.l.b16 %v264
    %v302 = vunpack.c.l.b16 %v265
    %v303 = vunpack.c.l.b16 %v266
    %v304 = vunpack.c.l.b16 %v267
    %v305 = vunpack.c.l.b16 %v268
    %v306 = vunpack.c.l.b16 %v269
    %v307 = vunpack.c.l.b16 %v270
    %v308 = vpack.c.b16 %v293, %v292
    %v309 = vpack.c.b16 %v295, %v294
    %v310 = vpack.c.b16 %v297, %v296
    %v311 = vpack.c.b16 %v299, %v298
    %v312 = vpack.c.b16 %v301, %v300
    %v313 = vpack.c.b16 %v303, %v302
    %v314 = vpack.c.b16 %v305, %v304
    %v315 = vpack.c.b16 %v307, %v306
    %324 = vmatprep.subr.bf16.mxu0 0
    %325 = vmatpush1.bf16.msra.mxu0 %v308
    %326 = vmatprep.subr.bf16.mxu0 0
    %327 = vmatpush1.bf16.msra.mxu0 %v309
    %328 = vmatprep.subr.bf16.mxu0 0
    %329 = vmatpush1.bf16.msra.mxu0 %v310
    %330 = vmatprep.subr.bf16.mxu0 0
    %331 = vmatpush1.bf16.msra.mxu0 %v311
    %332 = vmatprep.subr.bf16.mxu0 0
    %333 = vmatpush1.bf16.msra.mxu0 %v312
    %334 = vmatprep.subr.bf16.mxu0 0
    %335 = vmatpush1.bf16.msra.mxu0 %v313
    %336 = vmatprep.subr.bf16.mxu0 0
    %337 = vmatpush1.bf16.msra.mxu0 %v314
    %338 = vmatprep.subr.bf16.mxu0 0
    %339 = vmatpush1.bf16.msra.mxu0 %v315
    %340 = vmatprep.subr.bf16.mxu0 0
    %341 = vmatpush1.bf16.msra.mxu0 0
    %342 = vmatprep.subr.bf16.mxu0 0
    %343 = vmatpush1.bf16.msra.mxu0 0
    %344 = vmatprep.subr.bf16.mxu0 0
    %345 = vmatpush1.bf16.msra.mxu0 0
    %346 = vmatprep.subr.bf16.mxu0 0
    %347 = vmatpush1.bf16.msra.mxu0 0
    %348 = vmatprep.subr.bf16.mxu0 0
    %349 = vmatpush1.bf16.msra.mxu0 0
    %350 = vmatprep.subr.bf16.mxu0 0
    %351 = vmatpush1.bf16.msra.mxu0 0
    %352 = vmatprep.subr.bf16.mxu0 0
    %353 = vmatpush1.bf16.msra.mxu0 0
    %354 = vmatprep.subr.bf16.mxu0 0
    %355 = vmatpush1.bf16.msra.mxu0 0
    %356 = vmatprep.mubr.bf16.mxu0 0
    %357 = vmatmul.mubr.bf16.gmra.mrb[0].mxu0 %v253
    %v358 = vpop.f32.mrb[0].mxu0
    %v359 = vadd.f32 %v275, %v358
    %v360 = vpop.f32.mrb[0].mxu0
    %v361 = vpop.f32.mrb[0].mxu0
    %v362 = vpop.f32.mrb[0].mxu0
    %363 = vdwg.mxu0
    %v364 = vmax.f32 %v359, 0.0
    %v365 = vpack.c.bf16 %v364, %v364
    %s366 = scalar_lea.vmem [#allocation2], 192
    %v367 = vld [vmem:[%s366] sm:$0xf]
    %v368 = vld [vmem:[%s366 + $0x4] sm:$0xf]
    %v369 = vld [vmem:[%s366 + $0x8] sm:$0xf]
    %v370 = vld [vmem:[%s366 + $0xc] sm:$0xf]
    %v371 = vld [vmem:[%s366 + $0x10] sm:$0xf]
    %v372 = vld [vmem:[%s366 + $0x14] sm:$0xf]
    %v373 = vld [vmem:[%s366 + $0x18] sm:$0xf]
    %v374 = vld [vmem:[%s366 + $0x1c] sm:$0xf]
    %v375 = vld [vmem:[%s366 + $0x20] sm:$0xf]
    %v376 = vld [vmem:[%s366 + $0x24] sm:$0xf]
    %v377 = vld [vmem:[%s366 + $0x28] sm:$0xf]
    %v378 = vld [vmem:[%s366 + $0x2c] sm:$0xf]
    %v379 = vld [vmem:[%s366 + $0x30] sm:$0xf]
    %v380 = vld [vmem:[%s366 + $0x34] sm:$0xf]
    %v381 = vld [vmem:[%s366 + $0x38] sm:$0xf]
    %v382 = vld [vmem:[%s366 + $0x3c] sm:$0xf]
    %v383 = vld [vmem:[%s2 + $0x3] sm:$0x1]
    %v384 = vlaneseq
    %v385 = vshrl.u32 %v384, 7
    %v386 = vsub.s32 0, %v385
    %v387 = vrot.slane %v383, %v386
    %v404 = vunpack.c.l.b16 %v367
    %v405 = vunpack.c.l.b16 %v368
    %v406 = vunpack.c.l.b16 %v369
    %v407 = vunpack.c.l.b16 %v370
    %v408 = vunpack.c.l.b16 %v371
    %v409 = vunpack.c.l.b16 %v372
    %v410 = vunpack.c.l.b16 %v373
    %v411 = vunpack.c.l.b16 %v374
    %v412 = vunpack.c.l.b16 %v375
    %v413 = vunpack.c.l.b16 %v376
    %v414 = vunpack.c.l.b16 %v377
    %v415 = vunpack.c.l.b16 %v378
    %v416 = vunpack.c.l.b16 %v379
    %v417 = vunpack.c.l.b16 %v380
    %v418 = vunpack.c.l.b16 %v381
    %v419 = vunpack.c.l.b16 %v382
    %v420 = vpack.c.b16 %v405, %v404
    %v421 = vpack.c.b16 %v407, %v406
    %v422 = vpack.c.b16 %v409, %v408
    %v423 = vpack.c.b16 %v411, %v410
    %v424 = vpack.c.b16 %v413, %v412
    %v425 = vpack.c.b16 %v415, %v414
    %v426 = vpack.c.b16 %v417, %v416
    %v427 = vpack.c.b16 %v419, %v418
    %436 = vmatprep.subr.bf16.mxu0 0
    %437 = vmatpush1.bf16.msra.mxu0 %v420
    %438 = vmatprep.subr.bf16.mxu0 0
    %439 = vmatpush1.bf16.msra.mxu0 %v421
    %440 = vmatprep.subr.bf16.mxu0 0
    %441 = vmatpush1.bf16.msra.mxu0 %v422
    %442 = vmatprep.subr.bf16.mxu0 0
    %443 = vmatpush1.bf16.msra.mxu0 %v423
    %444 = vmatprep.subr.bf16.mxu0 0
    %445 = vmatpush1.bf16.msra.mxu0 %v424
    %446 = vmatprep.subr.bf16.mxu0 0
    %447 = vmatpush1.bf16.msra.mxu0 %v425
    %448 = vmatprep.subr.bf16.mxu0 0
    %449 = vmatpush1.bf16.msra.mxu0 %v426
    %450 = vmatprep.subr.bf16.mxu0 0
    %451 = vmatpush1.bf16.msra.mxu0 %v427
    %452 = vmatprep.subr.bf16.mxu0 0
    %453 = vmatpush1.bf16.msra.mxu0 0
    %454 = vmatprep.subr.bf16.mxu0 0
    %455 = vmatpush1.bf16.msra.mxu0 0
    %456 = vmatprep.subr.bf16.mxu0 0
    %457 = vmatpush1.bf16.msra.mxu0 0
    %458 = vmatprep.subr.bf16.mxu0 0
    %459 = vmatpush1.bf16.msra.mxu0 0
    %460 = vmatprep.subr.bf16.mxu0 0
    %461 = vmatpush1.bf16.msra.mxu0 0
    %462 = vmatprep.subr.bf16.mxu0 0
    %463 = vmatpush1.bf16.msra.mxu0 0
    %464 = vmatprep.subr.bf16.mxu0 0
    %465 = vmatpush1.bf16.msra.mxu0 0
    %466 = vmatprep.subr.bf16.mxu0 0
    %467 = vmatpush1.bf16.msra.mxu0 0
    %468 = vmatprep.mubr.bf16.mxu0 0
    %469 = vmatmul.mubr.bf16.gmra.mrb[0].mxu0 %v365
    %v470 = vpop.f32.mrb[0].mxu0
    %v471 = vadd.f32 %v387, %v470
    %v472 = vpop.f32.mrb[0].mxu0
    %v473 = vpop.f32.mrb[0].mxu0
    %v474 = vpop.f32.mrb[0].mxu0
    %475 = vdwg.mxu0
    %v476 = vmax.f32 %v471, 0.0
    %v477 = vpack.c.bf16 %v476, %v476
    %s478 = scalar_lea.vmem [#allocation2], 256
    %v479 = vld [vmem:[%s478] sm:$0xf]
    %v480 = vld [vmem:[%s478 + $0x4] sm:$0xf]
    %v481 = vld [vmem:[%s478 + $0x8] sm:$0xf]
    %v482 = vld [vmem:[%s478 + $0xc] sm:$0xf]
    %v483 = vld [vmem:[%s478 + $0x10] sm:$0xf]
    %v484 = vld [vmem:[%s478 + $0x14] sm:$0xf]
    %v485 = vld [vmem:[%s478 + $0x18] sm:$0xf]
    %v486 = vld [vmem:[%s478 + $0x1c] sm:$0xf]
    %v487 = vld [vmem:[%s478 + $0x20] sm:$0xf]
    %v488 = vld [vmem:[%s478 + $0x24] sm:$0xf]
    %v489 = vld [vmem:[%s478 + $0x28] sm:$0xf]
    %v490 = vld [vmem:[%s478 + $0x2c] sm:$0xf]
    %v491 = vld [vmem:[%s478 + $0x30] sm:$0xf]
    %v492 = vld [vmem:[%s478 + $0x34] sm:$0xf]
    %v493 = vld [vmem:[%s478 + $0x38] sm:$0xf]
    %v494 = vld [vmem:[%s478 + $0x3c] sm:$0xf]
    %v495 = vld [vmem:[%s2 + $0x4] sm:$0x1]
    %v496 = vlaneseq
    %v497 = vshrl.u32 %v496, 7
    %v498 = vsub.s32 0, %v497
    %v499 = vrot.slane %v495, %v498
    %v516 = vunpack.c.l.b16 %v479
    %v517 = vunpack.c.l.b16 %v480
    %v518 = vunpack.c.l.b16 %v481
    %v519 = vunpack.c.l.b16 %v482
    %v520 = vunpack.c.l.b16 %v483
    %v521 = vunpack.c.l.b16 %v484
    %v522 = vunpack.c.l.b16 %v485
    %v523 = vunpack.c.l.b16 %v486
    %v524 = vunpack.c.l.b16 %v487
    %v525 = vunpack.c.l.b16 %v488
    %v526 = vunpack.c.l.b16 %v489
    %v527 = vunpack.c.l.b16 %v490
    %v528 = vunpack.c.l.b16 %v491
    %v529 = vunpack.c.l.b16 %v492
    %v530 = vunpack.c.l.b16 %v493
    %v531 = vunpack.c.l.b16 %v494
    %v532 = vpack.c.b16 %v517, %v516
    %v533 = vpack.c.b16 %v519, %v518
    %v534 = vpack.c.b16 %v521, %v520
    %v535 = vpack.c.b16 %v523, %v522
    %v536 = vpack.c.b16 %v525, %v524
    %v537 = vpack.c.b16 %v527, %v526
    %v538 = vpack.c.b16 %v529, %v528
    %v539 = vpack.c.b16 %v531, %v530
    %548 = vmatprep.subr.bf16.mxu0 0
    %549 = vmatpush1.bf16.msra.mxu0 %v532
    %550 = vmatprep.subr.bf16.mxu0 0
    %551 = vmatpush1.bf16.msra.mxu0 %v533
    %552 = vmatprep.subr.bf16.mxu0 0
    %553 = vmatpush1.bf16.msra.mxu0 %v534
    %554 = vmatprep.subr.bf16.mxu0 0
    %555 = vmatpush1.bf16.msra.mxu0 %v535
    %556 = vmatprep.subr.bf16.mxu0 0
    %557 = vmatpush1.bf16.msra.mxu0 %v536
    %558 = vmatprep.subr.bf16.mxu0 0
    %559 = vmatpush1.bf16.msra.mxu0 %v537
    %560 = vmatprep.subr.bf16.mxu0 0
    %561 = vmatpush1.bf16.msra.mxu0 %v538
    %562 = vmatprep.subr.bf16.mxu0 0
    %563 = vmatpush1.bf16.msra.mxu0 %v539
    %564 = vmatprep.subr.bf16.mxu0 0
    %565 = vmatpush1.bf16.msra.mxu0 0
    %566 = vmatprep.subr.bf16.mxu0 0
    %567 = vmatpush1.bf16.msra.mxu0 0
    %568 = vmatprep.subr.bf16.mxu0 0
    %569 = vmatpush1.bf16.msra.mxu0 0
    %570 = vmatprep.subr.bf16.mxu0 0
    %571 = vmatpush1.bf16.msra.mxu0 0
    %572 = vmatprep.subr.bf16.mxu0 0
    %573 = vmatpush1.bf16.msra.mxu0 0
    %574 = vmatprep.subr.bf16.mxu0 0
    %575 = vmatpush1.bf16.msra.mxu0 0
    %576 = vmatprep.subr.bf16.mxu0 0
    %577 = vmatpush1.bf16.msra.mxu0 0
    %578 = vmatprep.subr.bf16.mxu0 0
    %579 = vmatpush1.bf16.msra.mxu0 0
    %580 = vmatprep.mubr.bf16.mxu0 0
    %581 = vmatmul.mubr.bf16.gmra.mrb[0].mxu0 %v477
    %v582 = vpop.f32.mrb[0].mxu0
    %v583 = vadd.f32 %v499, %v582
    %v584 = vpop.f32.mrb[0].mxu0
    %v585 = vpop.f32.mrb[0].mxu0
    %v586 = vpop.f32.mrb[0].mxu0
    %587 = vdwg.mxu0
    %588 = vadd.xlane.f32.xlu0 %v583
    %v589 = vpop.xlane.xlu0 %588
    %v590 = vrot.slane %v589, 4
    %v591 = vadd.f32 %v589, %v590
    %v592 = vrot.slane %v591, 2
    %v593 = vadd.f32 %v591, %v592
    %v594 = vrot.slane %v593, 1
    %v595 = vadd.f32 %v593, %v594
    %s596 = vtos %v595
    %vm597 = vcmask 7168
    %v598 = vsel %vm597, %v583, 0.0
    %599 = vadd.xlane.f32.xlu0 %v598
    %v600 = vpop.xlane.xlu0 %599
    %v601 = vrot.slane %v600, 4
    %v602 = vadd.f32 %v600, %v601
    %v603 = vrot.slane %v602, 2
    %v604 = vadd.f32 %v602, %v603
    %v605 = vrot.slane %v604, 1
    %v606 = vadd.f32 %v604, %v605
    %s607 = vtos %v606
    %s608 = ssub.f32 %s596, %s607
    %s609 = smul.f32 %s608, 0.03125
    %v610 = vstv %s609
    %v611 = vsub.f32 %v583, %v610
    %613 = vset.pattern.permute.xlu0 0
    %614 = vperm.xlu0 %613, %v583
    %v615 = vpop.permute.xlu0 %614
    %v617 = vadd.f32 %v615, %v611
    %618 = vst [vmem:[%s3] sm:$0xff] %v617
    // Predicated region
    $region18: #{dueling_qnetwork.1} parent=1 // pred_check
      _
    $region19: #{dueling_qnetwork.1} parent=1 // pred_check_branch
      %620 = sbr.rel (0) target = $region21
    $region20: #{dueling_qnetwork.1} parent=1 // pred_region
      _
    $region21: #{dueling_qnetwork.1} parent=1 // pred_fallthru
      _
    // Predicated region
    $region22: #{dueling_qnetwork.1} parent=1 // pred_check
      _
    $region23: #{dueling_qnetwork.1} parent=1 // pred_check_branch
      %622 = sbr.rel (0) target = $region25
    $region24: #{dueling_qnetwork.1} parent=1 // pred_region
      _
    $region25: #{dueling_qnetwork.1} parent=1 // pred_fallthru
      _
    %623 = vsyncpa [#allocation3], 1

</llo_original>
